<compile_context>
chip_gen: v5e
topology: v5e:2x2
jax: 0.10.0
libtpu: 0.0.40
codegen_flags: <defaults>
</compile_context>

<pallas_src>
import jax
import jax.numpy as jnp
from jax.experimental import pallas as pl
from jax.experimental.pallas import tpu as pltpu


def _linear_kernel(x_ref, w_ref, b_ref, o_ref):
    # x_ref: (TM, K) f32   w_ref: (K, N) f32   b_ref: (1, N) f32   o_ref: (TM, N) f32
    acc = jnp.dot(x_ref[...], w_ref[...], preferred_element_type=jnp.float32)
    o_ref[...] = (acc + b_ref[...]).astype(o_ref.dtype)


def _round_up(x, m):
    return ((x + m - 1) // m) * m


def _choose_tm(m_rows):
    # Small problems: one full-extent tile (block == full dim is always legal,
    # even if not a multiple of 8). Larger problems: aim for >= 2 tiles
    # (keeps both v7x TensorCores busy) with TM a multiple of 512, capped at
    # 8192 rows so double-buffered f32 tiles stay a few MiB.
    if m_rows <= 1024:
        return m_rows
    return min(8192, _round_up((m_rows + 1) // 2, 512))


@jax.jit
def slot_predictor_forward(inputs, weight, bias):
    """inputs: (bsz, seq_len, hidden_dim) f32
       weight: (hidden_dim, num_slot)     f32 (transposed vs torch Linear.weight)
       bias:   (num_slot,)                f32
       returns (bsz, seq_len, num_slot)   f32
    """
    bsz, seq_len, hidden_dim = inputs.shape
    num_slot = weight.shape[1]

    M, K, N = bsz * seq_len, hidden_dim, num_slot

    x2d = inputs.reshape(M, K)          # no pad, no cast — stream f32 directly
    b2d = bias.reshape(1, N).astype(jnp.float32)

    TM = _choose_tm(M)
    grid_m = pl.cdiv(M, TM)

    cost = pl.CostEstimate(
        flops=2 * M * K * N,
        transcendentals=0,
        bytes_accessed=(M * K * 4) + (K * N * 4) + (N * 4) + (M * N * 4),
    )

    out = pl.pallas_call(
        _linear_kernel,
        out_shape=jax.ShapeDtypeStruct((M, N), jnp.float32),
        grid_spec=pl.GridSpec(
            grid=(grid_m,),
            in_specs=[
                pl.BlockSpec((TM, K), lambda i: (i, 0)),   # x tiles stream
                pl.BlockSpec((K, N), lambda i: (0, 0)),    # weight resident
                pl.BlockSpec((1, N), lambda i: (0, 0)),    # bias resident
            ],
            out_specs=pl.BlockSpec((TM, N), lambda i: (i, 0)),
        ),
        compiler_params=pltpu.CompilerParams(
            dimension_semantics=("parallel",),   # shards row tiles across TCs on v7x
        ),
        cost_estimate=cost,
    )(x2d, weight, b2d)

    return out.reshape(bsz, seq_len, num_slot)


# TODO(synk): CRF loss/decode and the LVM branch are training/decoding
# utilities outside this forward pass (lvm=False, crf unused in forward) and
# are not implemented here.


if __name__ == "__main__":
    # Synthetic, deterministic parameters & inputs (no checkpoint loading).
    # params: hidden_dim=32, bidirection=True -> effective hidden_dim=64,
    #         num_slot=16, lvm=False, crf=False.
    bsz, seq_len = 2, 8
    hidden_dim = 64          # 32 * 2 (bidirectional)
    num_slot = 16

    key = jax.random.PRNGKey(0)
    k_x, k_w, k_b = jax.random.split(key, 3)

    inputs = jax.random.normal(k_x, (bsz, seq_len, hidden_dim), dtype=jnp.float32)
    # Mimic nn.Linear default init scale ~ U(-1/sqrt(fan_in), 1/sqrt(fan_in)).
    bound = 1.0 / jnp.sqrt(hidden_dim)
    weight = jax.random.uniform(
        k_w, (hidden_dim, num_slot), dtype=jnp.float32, minval=-bound, maxval=bound
    )
    bias = jax.random.uniform(
        k_b, (num_slot,), dtype=jnp.float32, minval=-bound, maxval=bound
    )

    pred = slot_predictor_forward(inputs, weight, bias)
    pred = jax.block_until_ready(pred)

    # Sanity check against plain-JAX f32 reference (f32 operands with f32 MXU
    # accumulation -> tight tolerance).
    ref = inputs @ weight + bias
    assert pred.shape == (bsz, seq_len, num_slot)
    assert jnp.allclose(pred, ref, atol=2e-2, rtol=2e-2), (
        float(jnp.max(jnp.abs(pred - ref)))
    )

    print("KERNEL_OK")
</pallas_src>

<mosaic_0001>
module attributes {stable_mosaic.version = 11 : i64} {
  func.func @_linear_kernel(%arg0: i32, %arg1: memref<16x64xf32, #tpu.memory_space<vmem>>, %arg2: memref<64x16xf32, #tpu.memory_space<vmem>>, %arg3: memref<1x16xf32, #tpu.memory_space<vmem>>, %arg4: memref<16x16xf32, #tpu.memory_space<vmem>>) attributes {dimension_semantics = [#tpu.dimension_semantics<parallel>], iteration_bounds = array<i64: 1>, scalar_prefetch = 0 : i64, scratch_operands = 0 : i64, tpu.core_type = #tpu.core_type<tc>, window_params = [{transform_indices = @transform_0, window_bounds = array<i64: 16, 64>}, {pipeline_mode = #tpu.pipeline_mode<synchronous>, transform_indices = @transform_1, window_bounds = array<i64: 64, 16>}, {pipeline_mode = #tpu.pipeline_mode<synchronous>, transform_indices = @transform_2, window_bounds = array<i64: 1, 16>}, {transform_indices = @transform_3, window_bounds = array<i64: 16, 16>}]} {
    %c0 = arith.constant 0 : index
    %c0_0 = arith.constant 0 : index
    %0 = vector.load %arg1[%c0, %c0_0] : memref<16x64xf32, #tpu.memory_space<vmem>>, vector<16x64xf32>
    %c0_1 = arith.constant 0 : index
    %c0_2 = arith.constant 0 : index
    %1 = vector.load %arg2[%c0_1, %c0_2] : memref<64x16xf32, #tpu.memory_space<vmem>>, vector<64x16xf32>
    %cst = arith.constant dense<0.000000e+00> : vector<16x16xf32>
    %2 = tpu.matmul %0, %1, %cst {dimension_numbers = #tpu.dot_dimension_numbers<[1], [0], [0], [1], [0, 0, 1, 1], [], []>} : vector<16x64xf32>, vector<64x16xf32>, vector<16x16xf32> -> vector<16x16xf32>
    %c0_3 = arith.constant 0 : index
    %c0_4 = arith.constant 0 : index
    %3 = vector.load %arg3[%c0_3, %c0_4] : memref<1x16xf32, #tpu.memory_space<vmem>>, vector<1x16xf32>
    %4 = vector.broadcast %3 : vector<1x16xf32> to vector<16x16xf32>
    %5 = arith.addf %2, %4 : vector<16x16xf32>
    %c0_5 = arith.constant 0 : index
    %c0_6 = arith.constant 0 : index
    %6 = vector.load %arg4[%c0_5, %c0_6] : memref<16x16xf32, #tpu.memory_space<vmem>>, vector<16x16xf32>
    tpu.vector_store %arg4[%c0_5, %c0_6], %5 {strides = array<i32>} : memref<16x16xf32, #tpu.memory_space<vmem>>, vector<16x16xf32>,
    return
  }
  func.func @transform_0(%arg0: i32) -> (i32, i32) {
    %c0_i32 = arith.constant 0 : i32
    %c0_i32_0 = arith.constant 0 : i32
    return %arg0, %c0_i32 : i32, i32
  }
  func.func @transform_1(%arg0: i32) -> (i32, i32) {
    %c0_i32 = arith.constant 0 : i32
    %c0_i32_0 = arith.constant 0 : i32
    %c0_i32_1 = arith.constant 0 : i32
    return %c0_i32, %c0_i32_0 : i32, i32
  }
  func.func @transform_2(%arg0: i32) -> (i32, i32) {
    %c0_i32 = arith.constant 0 : i32
    %c0_i32_0 = arith.constant 0 : i32
    %c0_i32_1 = arith.constant 0 : i32
    return %c0_i32, %c0_i32_0 : i32, i32
  }
  func.func @transform_3(%arg0: i32) -> (i32, i32) {
    %c0_i32 = arith.constant 0 : i32
    %c0_i32_0 = arith.constant 0 : i32
    return %arg0, %c0_i32 : i32, i32
  }
}

</mosaic_0001>

<llo_original>
// kernel: slot_predictor_forward.1
$region0: #{slot_predictor_forward.1}
  #allocation0 [shape = 'u32[]', space=smem, size = 0x4, offset = 0x4, fixed_abs, tag = 'smem constant byte address 0x4 - core index']
  #allocation1 [shape = 'u32[72,128]{1,0:T(1,128)}', space=vmem, size = 0x9000, scoped, tag = 'internal scratch']
  %s0 = inlined_call_operand.vmem [shape: f32[16,64], index: 0, kind: input, shape index: {}]
  %s1 = inlined_call_operand.vmem [shape: f32[64,16], index: 1, kind: input, shape index: {}]
  %s2 = inlined_call_operand.vmem [shape: f32[1,16], index: 2, kind: input, shape index: {}]
  %s3 = inlined_call_operand.hbm [shape: f32[16,16], index: 3, kind: output, shape index: {}]
  %s4 = sld [smem:[#allocation0]]
  $region22: #{slot_predictor_forward.1} parent=0
    _
  %s6 = ssub.s32 1, %s4
  %s7 = scalar_select 0, %s6, %s4
  $region1: #{slot_predictor_forward.1} parent=0
    #allocation2 [shape = 'u8[8192]{0}', space=vmem, size = 0x2000, scoped, tag = 'output window, operand 0, single buffered']
    #allocation3 [shape = 's32[1]{0}', space=sflag, size = 0x4, scoped, tag = 'scoped memory for slot_predictor_forward.1']
    %8 = vsyncpa [#allocation3], 0
    // Predicated region
    $region2: #{slot_predictor_forward.1} parent=1 // pred_check
      _
    $region3: #{slot_predictor_forward.1} parent=1 // pred_check_branch
      %10 = sbr.rel (0) target = $region5
    $region4: #{slot_predictor_forward.1} parent=1 // pred_region
      _
    $region5: #{slot_predictor_forward.1} parent=1 // pred_fallthru
      _
    // Predicated region
    $region6: #{slot_predictor_forward.1} parent=1 // pred_check
      _
    $region7: #{slot_predictor_forward.1} parent=1 // pred_check_branch
      %12 = sbr.rel (0) target = $region9
    $region8: #{slot_predictor_forward.1} parent=1 // pred_region
      _
    $region9: #{slot_predictor_forward.1} parent=1 // pred_fallthru
      _
    // Predicated region
    $region10: #{slot_predictor_forward.1} parent=1 // pred_check
      _
    $region11: #{slot_predictor_forward.1} parent=1 // pred_check_branch
      %14 = sbr.rel (0) target = $region13
    $region12: #{slot_predictor_forward.1} parent=1 // pred_region
      _
    $region13: #{slot_predictor_forward.1} parent=1 // pred_fallthru
      _
    %v15 = vld [vmem:[%s0] sm:$0xff]
    %v16 = vld [vmem:[%s0 + $0x8] sm:$0xff]
    %v17 = vld [vmem:[%s1] sm:$0xff]
    %v18 = vld [vmem:[%s1 + $0x8] sm:$0xff]
    %v19 = vld [vmem:[%s1 + $0x10] sm:$0xff]
    %v20 = vld [vmem:[%s1 + $0x18] sm:$0xff]
    %v21 = vld [vmem:[%s1 + $0x20] sm:$0xff]
    %v22 = vld [vmem:[%s1 + $0x28] sm:$0xff]
    %v23 = vld [vmem:[%s1 + $0x30] sm:$0xff]
    %v24 = vld [vmem:[%s1 + $0x38] sm:$0xff]
    %v25 = vld [vmem:[%s2] sm:$0x1]
    %v27 = vperm.slane %v25, 0
    %vm29 = vcmask 523264
    %v31 = vsel %vm29, %v15, 0
    %v34 = vsel %vm29, %v16, 0
    %36 = vmatpush.msra.mxu0 0.0
    %37 = vmatpush.msra.mxu0 0.0
    %38 = vmatpush.msra.mxu0 0.0
    %39 = vmatpush.msra.mxu0 0.0
    %40 = vmatpush.msra.mxu0 0.0
    %41 = vmatpush.msra.mxu0 0.0
    %42 = vmatpush.msra.mxu0 0.0
    %43 = vmatpush.msra.mxu0 0.0
    %44 = vmatpush.msra.mxu0 %v24
    %45 = vmatpush.msra.mxu0 %v23
    %46 = vmatpush.msra.mxu0 %v22
    %47 = vmatpush.msra.mxu0 %v21
    %48 = vmatpush.msra.mxu0 %v20
    %49 = vmatpush.msra.mxu0 %v19
    %50 = vmatpush.msra.mxu0 %v18
    %51 = vmatpush.msra.mxu0 %v17
    %52 = vmatmul.f32.gmra.mxu0 %v31
    %v53 = vpop.f32.mrf.mxu0
    %v54 = vadd.f32 %v27, %v53
    %55 = vmatmul.f32.gmra.mxu0 %v34
    %v56 = vpop.f32.mrf.mxu0
    %v57 = vadd.f32 %v27, %v56
    %58 = vdwg.mxu0
    %vm59 = vcmask 130048
    %60 = vst.msk [vmem:[#allocation2] sm:$0xff] %vm59, %v54
    %61 = vst.msk [vmem:[#allocation2 + $0x8] sm:$0xff] %vm59, %v57
    // Predicated region
    $region14: #{slot_predictor_forward.1} parent=1 // pred_check
      _
    $region15: #{slot_predictor_forward.1} parent=1 // pred_check_branch
      %63 = sbr.rel (0) target = $region17
    $region16: #{slot_predictor_forward.1} parent=1 // pred_region
      %65 = vsyncadd [#allocation3], 0
      %s66 = sshll.u32 [#allocation2], 4
      %s67 = int_to_ptr.vmem [resolvable:$true] %s66
      %s68 = sshll.u32 %s3, 4
      %s69 = int_to_ptr.hbm [resolvable:$true] %s68
      %74 = dma.vmem_to_hbm [thread:$0]  %s67, 256, %s69, [#allocation3], 128, 128, 8
    $region17: #{slot_predictor_forward.1} parent=1 // pred_fallthru
      _
    // Predicated region
    $region18: #{slot_predictor_forward.1} parent=1 // pred_check
      _
    $region19: #{slot_predictor_forward.1} parent=1 // pred_check_branch
      %76 = sbr.rel (0) target = $region21
    $region20: #{slot_predictor_forward.1} parent=1 // pred_region
      %78 = dma.done [#allocation3], 256
    $region21: #{slot_predictor_forward.1} parent=1 // pred_fallthru
      _
    %79 = vsyncpa [#allocation3], 1

</llo_original>
